<compile_context>
chip_gen: v7x
topology: tpu7x:2x2x1
jax: 0.10.0
libtpu: 0.0.40
codegen_flags: <defaults>
</compile_context>

<pallas_src>
import functools

import jax
import jax.numpy as jnp
from jax import lax
from jax.experimental import pallas as pl
from jax.experimental.pallas import tpu as pltpu


def _eff_mse_kernel(pred_ref, true_ref, loss_ref, *, threshold, L):
    # pred_ref / true_ref: (tb, L) VMEM tiles in their native dtype.
    # loss_ref: (tb, 1) f32 per-sample loss.
    p_nat = pred_ref[...]
    t_nat = true_ref[...]

    # Threshold/mask pass in the input dtype (bf16 stays packed on v6e/v7x).
    ap = jnp.abs(p_nat)
    at = jnp.abs(t_nat)

    max_p = jnp.max(ap, axis=1, keepdims=True) + jnp.asarray(1e-6, ap.dtype)
    max_t = jnp.max(at, axis=1, keepdims=True) + jnp.asarray(1e-6, at.dtype)

    mask = (ap > jnp.asarray(threshold, ap.dtype) * max_p) | (
        at > jnp.asarray(threshold, at.dtype) * max_t)

    idx = lax.broadcasted_iota(jnp.int32, mask.shape, 1)  # (tb, L)

    # torch argmax(mask.float()) == first True index, or 0 if mask is all
    # False; the reversed argmax gives the last True index, or L-1 if all
    # False.
    first_true = jnp.min(jnp.where(mask, idx, jnp.int32(L)), axis=1, keepdims=True)
    last_true = jnp.max(jnp.where(mask, idx, jnp.int32(-1)), axis=1, keepdims=True)
    any_true = last_true >= 0  # cheaper than a separate jnp.any cross-lane reduce

    idx_start = jnp.where(any_true, first_true, jnp.int32(0))
    idx_end = jnp.where(any_true, last_true, jnp.int32(L - 1))

    # Fused contiguous-window test: for start <= end,
    #   start <= idx <= end  <=>  uint32(idx - start) <= uint32(end - start)
    # (2 full-size ops instead of 3).
    rel = idx - idx_start                    # (tb, L)
    span = idx_end - idx_start               # (tb, 1), always >= 0
    mask_eff = pltpu.bitcast(rel, jnp.uint32) <= pltpu.bitcast(span, jnp.uint32)

    # Squared error accumulated in f32 regardless of input dtype.
    diff = p_nat.astype(jnp.float32) - t_nat.astype(jnp.float32)
    masked_error = jnp.where(mask_eff, diff * diff, jnp.float32(0.0))
    err_sum = jnp.sum(masked_error, axis=1, keepdims=True)  # (tb, 1)

    # mask_eff is a contiguous [start, end] window, so its population count is
    # exactly end - start + 1 (always >= 1): no cross-lane sum, no clamp.
    counts = (span + 1).astype(jnp.float32)
    loss_ref[...] = err_sum / counts


def _physical_vmem_bytes():
    """Per-core VMEM capacity; conservative fallback = v7x's 64 MiB."""
    try:
        info = pltpu.get_tpu_info()
        cap = getattr(info, "vmem_capacity_bytes", None)
        if cap:
            return int(cap)
    except Exception:
        pass
    return 64 * 1024 * 1024


def _sublane_multiple(dtype):
    # Sublane packing multiple: f32 -> 8, bf16/f16 -> 16, int8/fp8 -> 32.
    return max(8, 32 // jnp.dtype(dtype).itemsize)


def _choose_tb(B, L, sub, itemsize, *, target_block_bytes=4 << 20,
               min_steps=8, max_rows=1024):
    """Rows per grid step.

    Cap each input block at ~4 MiB, keep at least `min_steps` grid steps when
    the batch is big enough (DMA/compute overlap; both v7x TCs get work), cap
    at 1024 rows (bigger tiles buy <1-2% HBM roofline), and round down to the
    dtype's sublane packing multiple.  The caller pads B up to a multiple of
    tb, so tb never has to divide B.
    """
    rows_by_bytes = max(sub, target_block_bytes // (L * itemsize))
    rows_by_steps = max(sub, -(-B // min_steps))  # ceil(B / min_steps)
    tb = min(rows_by_bytes, rows_by_steps, max_rows)
    tb -= tb % sub
    return max(tb, sub)


def effective_mse_loss(y_pred, y_true, threshold=0.001, tb=None):
    """Effective-segment MSE, matching the PyTorch EffectiveMSELoss forward.

    Inputs are consumed in their native dtype; bf16 callers roughly halve HBM
    read traffic (mask math stays bf16, squared error is accumulated in f32).
    """
    B, L = y_pred.shape
    assert y_true.shape == (B, L)

    sub = max(_sublane_multiple(y_pred.dtype), _sublane_multiple(y_true.dtype))
    itemsize = max(jnp.dtype(y_pred.dtype).itemsize,
                   jnp.dtype(y_true.dtype).itemsize)

    if tb is None:
        tb = _choose_tb(B, L, sub, itemsize)
    else:
        assert tb % sub == 0, "tb must be a multiple of the sublane packing"

    # Pad the batch up to a multiple of tb; padded rows are all-zero (loss 0)
    # and are sliced off before the final mean.
    Bp = -(-B // tb) * tb
    if Bp != B:
        pad = ((0, Bp - B), (0, 0))
        y_pred = jnp.pad(y_pred, pad)
        y_true = jnp.pad(y_true, pad)

    grid = (Bp // tb,)

    # VMEM claim: 2 inputs x double buffering + ~6 live full-tile f32
    # temporaries in the body; ~2x that plus slack, never > 3/4 of physical.
    vmem_cap = _physical_vmem_bytes()
    block_bytes = tb * L * itemsize
    footprint = 2 * 2 * block_bytes + 6 * tb * L * 4
    vmem_limit = int(min(max(2 * footprint + (8 << 20), 16 << 20),
                         vmem_cap * 3 // 4))

    cost = pl.CostEstimate(
        flops=18 * Bp * L,
        transcendentals=0,
        bytes_accessed=Bp * L * (jnp.dtype(y_pred.dtype).itemsize
                                 + jnp.dtype(y_true.dtype).itemsize) + 4 * Bp,
    )

    per_sample = pl.pallas_call(
        functools.partial(_eff_mse_kernel, threshold=float(threshold), L=L),
        out_shape=jax.ShapeDtypeStruct((Bp, 1), jnp.float32),
        grid=grid,
        in_specs=[
            pl.BlockSpec((tb, L), lambda i: (i, 0)),
            pl.BlockSpec((tb, L), lambda i: (i, 0)),
        ],
        # Per-sample output: tb*4 bytes per step (negligible vs 2*tb*L reads),
        # so the (tb, 1) block is kept rather than forcing a sublane->lane
        # relayout for a lane-dense store.
        out_specs=pl.BlockSpec((tb, 1), lambda i: (i, 0)),
        compiler_params=pltpu.CompilerParams(
            dimension_semantics=("parallel",),
            vmem_limit_bytes=vmem_limit,
        ),
        cost_estimate=cost,
    )(y_pred, y_true)

    # mean over the original (unpadded) batch (glue)
    return jnp.mean(per_sample[:B, 0])


def _reference(y_pred, y_true, threshold=0.001):
    """Pure-JAX replica of the PyTorch forward, for a sanity check."""
    B, L = y_pred.shape
    max_p = jnp.max(jnp.abs(y_pred), axis=1, keepdims=True) + 1e-6
    max_t = jnp.max(jnp.abs(y_true), axis=1, keepdims=True) + 1e-6
    mask = (jnp.abs(y_pred) > threshold * max_p) | (jnp.abs(y_true) > threshold * max_t)
    idx_start = jnp.argmax(mask.astype(jnp.float32), axis=1)
    idx_end = L - jnp.argmax(mask[:, ::-1].astype(jnp.float32), axis=1) - 1
    rng = jnp.arange(L)[None, :]
    mask_eff = (rng >= idx_start[:, None]) & (rng <= idx_end[:, None])
    diff_sq = (y_pred.astype(jnp.float32) - y_true.astype(jnp.float32)) ** 2
    masked = diff_sq * mask_eff
    counts = jnp.maximum(mask_eff.sum(axis=1), 1)
    return jnp.mean(masked.sum(axis=1) / counts)


if __name__ == "__main__":
    key = jax.random.PRNGKey(0)

    def make_case(k, B, L):
        kp, kt, ks, ke = jax.random.split(k, 4)
        y_pred = jax.random.normal(kp, (B, L), dtype=jnp.float32)
        y_true = jax.random.normal(kt, (B, L), dtype=jnp.float32)
        # Zero out leading / trailing edges per row so the effective-segment
        # (start/end) logic is actually exercised.
        starts = jax.random.randint(ks, (B, 1), 0, L // 4)
        ends = jax.random.randint(ke, (B, 1), 3 * L // 4, L)
        pos = jnp.arange(L)[None, :]
        window = ((pos >= starts) & (pos < ends)).astype(jnp.float32)
        return y_pred * window, y_true * window

    k1, k2 = jax.random.split(key)

    # Case 1: small aligned batch.
    p1, t1 = make_case(k1, B=8, L=256)
    loss1 = jax.block_until_ready(effective_mse_loss(p1, t1))
    ref1 = _reference(p1, t1)
    assert jnp.allclose(loss1, ref1, atol=1e-6, rtol=1e-5), (loss1, ref1)

    # Case 2: batch not a multiple of the tile -> exercises the padding path.
    p2, t2 = make_case(k2, B=20, L=384)
    loss2 = jax.block_until_ready(effective_mse_loss(p2, t2))
    ref2 = _reference(p2, t2)
    assert jnp.allclose(loss2, ref2, atol=1e-6, rtol=1e-5), (loss2, ref2)

    print("KERNEL_OK")
</pallas_src>

<mosaic_0001>
module attributes {stable_mosaic.version = 11 : i64} {
  func.func @_eff_mse_kernel(%arg0: i32, %arg1: memref<8x256xf32, #tpu.memory_space<vmem>>, %arg2: memref<8x256xf32, #tpu.memory_space<vmem>>, %arg3: memref<8x1xf32, #tpu.memory_space<vmem>>) attributes {dimension_semantics = [#tpu.dimension_semantics<parallel>], iteration_bounds = array<i64: 1>, scalar_prefetch = 0 : i64, scratch_operands = 0 : i64, tpu.core_type = #tpu.core_type<tc>, window_params = [{transform_indices = @transform_0, window_bounds = array<i64: 8, 256>}, {transform_indices = @transform_1, window_bounds = array<i64: 8, 256>}, {transform_indices = @transform_2, window_bounds = array<i64: 8, 1>}]} {
    %c0 = arith.constant 0 : index
    %c0_0 = arith.constant 0 : index
    %0 = vector.load %arg1[%c0, %c0_0] : memref<8x256xf32, #tpu.memory_space<vmem>>, vector<8x256xf32>
    %c0_1 = arith.constant 0 : index
    %c0_2 = arith.constant 0 : index
    %1 = vector.load %arg2[%c0_1, %c0_2] : memref<8x256xf32, #tpu.memory_space<vmem>>, vector<8x256xf32>
    %2 = math.absf %0 : vector<8x256xf32>
    %3 = math.absf %1 : vector<8x256xf32>
    %cst = arith.constant dense<0xFF800000> : vector<8xf32>
    %4 = vector.multi_reduction <maximumf>, %2, %cst [1] : vector<8x256xf32> to vector<8xf32>
    %5 = vector.shape_cast %4 : vector<8xf32> to vector<8x1xf32>
    %cst_3 = arith.constant 9.99999997E-7 : f32
    %6 = vector.broadcast %cst_3 : f32 to vector<8x1xf32>
    %7 = arith.addf %5, %6 : vector<8x1xf32>
    %cst_4 = arith.constant dense<0xFF800000> : vector<8xf32>
    %8 = vector.multi_reduction <maximumf>, %3, %cst_4 [1] : vector<8x256xf32> to vector<8xf32>
    %9 = vector.shape_cast %8 : vector<8xf32> to vector<8x1xf32>
    %cst_5 = arith.constant 9.99999997E-7 : f32
    %10 = vector.broadcast %cst_5 : f32 to vector<8x1xf32>
    %11 = arith.addf %9, %10 : vector<8x1xf32>
    %cst_6 = arith.constant 1.000000e-03 : f32
    %12 = vector.broadcast %cst_6 : f32 to vector<8x1xf32>
    %13 = arith.mulf %12, %7 : vector<8x1xf32>
    %14 = vector.broadcast %13 : vector<8x1xf32> to vector<8x256xf32>
    %15 = arith.cmpf ogt, %2, %14 : vector<8x256xf32>
    %cst_7 = arith.constant 1.000000e-03 : f32
    %16 = vector.broadcast %cst_7 : f32 to vector<8x1xf32>
    %17 = arith.mulf %16, %11 : vector<8x1xf32>
    %18 = vector.broadcast %17 : vector<8x1xf32> to vector<8x256xf32>
    %19 = arith.cmpf ogt, %3, %18 : vector<8x256xf32>
    %20 = arith.ori %15, %19 : vector<8x256xi1>
    %21 = tpu.iota {dimensions = array<i32: 1>} : vector<8x256xi32>
    %c256_i32 = arith.constant 256 : i32
    %22 = vector.broadcast %c256_i32 : i32 to vector<8x256xi32>
    %23 = arith.select %20, %21, %22 : vector<8x256xi1>, vector<8x256xi32>
    %cst_8 = arith.constant dense<2147483647> : vector<8xi32>
    %24 = vector.multi_reduction <minsi>, %23, %cst_8 [1] : vector<8x256xi32> to vector<8xi32>
    %25 = vector.shape_cast %24 : vector<8xi32> to vector<8x1xi32>
    %c-1_i32 = arith.constant -1 : i32
    %26 = vector.broadcast %c-1_i32 : i32 to vector<8x256xi32>
    %27 = arith.select %20, %21, %26 : vector<8x256xi1>, vector<8x256xi32>
    %cst_9 = arith.constant dense<-2147483648> : vector<8xi32>
    %28 = vector.multi_reduction <maxsi>, %27, %cst_9 [1] : vector<8x256xi32> to vector<8xi32>
    %29 = vector.shape_cast %28 : vector<8xi32> to vector<8x1xi32>
    %c0_i32 = arith.constant 0 : i32
    %30 = vector.broadcast %c0_i32 : i32 to vector<8x1xi32>
    %31 = arith.cmpi sge, %29, %30 : vector<8x1xi32>
    %c0_i32_10 = arith.constant 0 : i32
    %32 = vector.broadcast %c0_i32_10 : i32 to vector<8x1xi32>
    %33 = arith.select %31, %25, %32 : vector<8x1xi1>, vector<8x1xi32>
    %c255_i32 = arith.constant 255 : i32
    %34 = vector.broadcast %c255_i32 : i32 to vector<8x1xi32>
    %35 = arith.select %31, %29, %34 : vector<8x1xi1>, vector<8x1xi32>
    %36 = vector.broadcast %33 : vector<8x1xi32> to vector<8x256xi32>
    %37 = arith.subi %21, %36 : vector<8x256xi32>
    %38 = arith.subi %35, %33 : vector<8x1xi32>
    %39 = tpu.bitcast %37 : vector<8x256xi32> -> vector<8x256xi32>
    %40 = tpu.bitcast %38 : vector<8x1xi32> -> vector<8x1xi32>
    %41 = vector.broadcast %40 : vector<8x1xi32> to vector<8x256xi32>
    %42 = arith.cmpi ule, %39, %41 : vector<8x256xi32>
    %43 = arith.subf %0, %1 : vector<8x256xf32>
    %44 = arith.mulf %43, %43 : vector<8x256xf32>
    %cst_11 = arith.constant 0.000000e+00 : f32
    %45 = vector.broadcast %cst_11 : f32 to vector<8x256xf32>
    %46 = arith.select %42, %44, %45 : vector<8x256xi1>, vector<8x256xf32>
    %cst_12 = arith.constant dense<0.000000e+00> : vector<8xf32>
    %47 = vector.multi_reduction <add>, %46, %cst_12 [1] : vector<8x256xf32> to vector<8xf32>
    %48 = vector.shape_cast %47 : vector<8xf32> to vector<8x1xf32>
    %c1_i32 = arith.constant 1 : i32
    %49 = vector.broadcast %c1_i32 : i32 to vector<8x1xi32>
    %50 = arith.addi %38, %49 : vector<8x1xi32>
    %51 = arith.sitofp %50 : vector<8x1xi32> to vector<8x1xf32>
    %52 = arith.divf %48, %51 : vector<8x1xf32>
    %c0_13 = arith.constant 0 : index
    %c0_14 = arith.constant 0 : index
    %53 = vector.load %arg3[%c0_13, %c0_14] : memref<8x1xf32, #tpu.memory_space<vmem>>, vector<8x1xf32>
    tpu.vector_store %arg3[%c0_13, %c0_14], %52 {strides = array<i32>} : memref<8x1xf32, #tpu.memory_space<vmem>>, vector<8x1xf32>,
    return
  }
  func.func @transform_0(%arg0: i32) -> (i32, i32) {
    %c0_i32 = arith.constant 0 : i32
    %c0_i32_0 = arith.constant 0 : i32
    return %arg0, %c0_i32 : i32, i32
  }
  func.func @transform_1(%arg0: i32) -> (i32, i32) {
    %c0_i32 = arith.constant 0 : i32
    %c0_i32_0 = arith.constant 0 : i32
    return %arg0, %c0_i32 : i32, i32
  }
  func.func @transform_2(%arg0: i32) -> (i32, i32) {
    %c0_i32 = arith.constant 0 : i32
    %c0_i32_0 = arith.constant 0 : i32
    return %arg0, %c0_i32 : i32, i32
  }
}

</mosaic_0001>

<llo_original>
// kernel: tpu_custom_call.1
$region0: #{tpu_custom_call.1}
  #allocation0 [shape = 'u32[]', space=smem, size = 0x4, offset = 0x4, fixed_abs, tag = 'smem constant byte address 0x4 - core index']
  #allocation1 [shape = 'u32[144,128]{1,0:T(1,128)}', space=vmem, size = 0x12000, scoped, tag = 'internal scratch']
  %s0 = inlined_call_operand.hbm [shape: f32[8,256], index: 0, kind: input, shape index: {}]
  %s1 = inlined_call_operand.hbm [shape: f32[8,256], index: 1, kind: input, shape index: {}]
  %s2 = inlined_call_operand.vmem [shape: f32[8,1], index: 2, kind: output, shape index: {}]
  %s3 = sld [smem:[#allocation0]]
  $region26: #{tpu_custom_call.1} parent=0
    _
  %s5 = ssub.s32 1, %s3
  %s6 = scalar_select 0, %s5, %s3
  $region1: #{tpu_custom_call.1} parent=0
    #allocation2 [shape = 'u8[8192]{0}', space=vmem, size = 0x2000, scoped, tag = 'input window, operand 0, single buffered']
    #allocation3 [shape = 's32[1]{0}', space=sflag, size = 0x4, scoped, tag = 'scoped memory for tpu_custom_call.1']
    #allocation4 [shape = 'u8[8192]{0}', space=vmem, size = 0x2000, scoped, tag = 'input window, operand 1, single buffered']
    #allocation5 [shape = 's32[1]{0}', space=sflag, size = 0x4, scoped, tag = 'scoped memory for tpu_custom_call.1']
    %7 = vsyncpa [#allocation3], 0
    %8 = vsyncpa [#allocation5], 0
    // Predicated region
    $region2: #{tpu_custom_call.1} parent=1 // pred_check
      _
    $region3: #{tpu_custom_call.1} parent=1 // pred_check_branch
      %10 = sbr.rel (0) target = $region5
    $region4: #{tpu_custom_call.1} parent=1 // pred_region
      %s12 = ssub.s32 256, 256
      %13 = vsyncadd [#allocation3], %s12
      %s15 = sshll.u32 [#allocation2], 4
      %s16 = int_to_ptr.vmem [resolvable:$true] %s15
      %18 = dma.hbm_to_vmem [thread:$0]  %s0, 256, %s16, [#allocation3]
    $region5: #{tpu_custom_call.1} parent=1 // pred_fallthru
      _
    // Predicated region
    $region6: #{tpu_custom_call.1} parent=1 // pred_check
      _
    $region7: #{tpu_custom_call.1} parent=1 // pred_check_branch
      %20 = sbr.rel (0) target = $region9
    $region8: #{tpu_custom_call.1} parent=1 // pred_region
      %s22 = ssub.s32 256, 256
      %23 = vsyncadd [#allocation5], %s22
      %s25 = sshll.u32 [#allocation4], 4
      %s26 = int_to_ptr.vmem [resolvable:$true] %s25
      %28 = dma.hbm_to_vmem [thread:$0]  %s1, 256, %s26, [#allocation5]
    $region9: #{tpu_custom_call.1} parent=1 // pred_fallthru
      _
    // Predicated region
    $region10: #{tpu_custom_call.1} parent=1 // pred_check
      _
    $region11: #{tpu_custom_call.1} parent=1 // pred_check_branch
      %30 = sbr.rel (0) target = $region13
    $region12: #{tpu_custom_call.1} parent=1 // pred_region
      %31 = dma.done [#allocation3], 256
    $region13: #{tpu_custom_call.1} parent=1 // pred_fallthru
      _
    // Predicated region
    $region14: #{tpu_custom_call.1} parent=1 // pred_check
      _
    $region15: #{tpu_custom_call.1} parent=1 // pred_check_branch
      %33 = sbr.rel (0) target = $region17
    $region16: #{tpu_custom_call.1} parent=1 // pred_region
      %34 = dma.done [#allocation5], 256
    $region17: #{tpu_custom_call.1} parent=1 // pred_fallthru
      _
    %v35 = vld [vmem:[#allocation2] sm:$0xff]
    %v36 = vld [vmem:[#allocation2 + $0x8] sm:$0xff]
    %v37 = vld [vmem:[#allocation4] sm:$0xff]
    %v38 = vld [vmem:[#allocation4 + $0x8] sm:$0xff]
    %v39 = vand.u32 2147483647, %v35
    %v40 = vand.u32 2147483647, %v36
    %v41 = vand.u32 2147483647, %v37
    %v42 = vand.u32 2147483647, %v38
    %v43 = vmax.f32 %v39, %v40
    %44 = vmax.xlane.f32.xlu0 %v43
    %v45 = vpop.xlane.xlu0 %44
    %v46 = vadd.f32 %v45, 1e-06
    %v47 = vmax.f32 %v41, %v42
    %48 = vmax.xlane.f32.xlu0 %v47
    %v49 = vpop.xlane.xlu0 %48
    %v50 = vadd.f32 %v49, 1e-06
    %v51 = vmul.f32 %v46, 0.001
    %vm52 = vcmp.gt.f32.partialorder %v39, %v51
    %vm53 = vcmp.gt.f32.partialorder %v40, %v51
    %v54 = vmul.f32 %v50, 0.001
    %vm55 = vcmp.gt.f32.partialorder %v41, %v54
    %vm56 = vcmp.gt.f32.partialorder %v42, %v54
    %vm57 = vmor %vm52, %vm55
    %vm58 = vmor %vm53, %vm56
    %v59 = vlaneseq
    %v60 = vand.u32 %v59, 127
    %v61 = vadd.s32 %v60, 128
    %v62 = vsel %vm57, %v60, 256
    %v63 = vsel %vm58, %v61, 256
    %vm64 = vcmp.lt.s32.totalorder %v62, %v63
    %v65 = vsel %vm64, %v62, %v63
    %v66 = vand.u32 %v65, 65535
    %v67 = vshra.s32 %v65, 16
    %v68 = vcvt.s32.f32 %v66
    %v69 = vcvt.s32.f32 %v67
    %70 = vmin.xlane.f32.xlu0 %v69
    %v71 = vpop.xlane.xlu0 %70
    %vm72 = vcmp.eq.f32.partialorder %v69, %v71
    %v73 = vsel %vm72, %v68, inf
    %74 = vmin.xlane.f32.xlu0 %v73
    %v75 = vpop.xlane.xlu0 %74
    %v76 = vcvt.f32.s32 %v75
    %v77 = vcvt.f32.s32 %v71
    %v78 = vshll.u32 %v77, 16
    %v79 = vadd.s32 %v78, %v76
    %v80 = vsel %vm57, %v60, 4294967295
    %v81 = vsel %vm58, %v61, 4294967295
    %vm82 = vcmp.gt.s32.totalorder %v80, %v81
    %v83 = vsel %vm82, %v80, %v81
    %v84 = vand.u32 %v83, 65535
    %v85 = vshra.s32 %v83, 16
    %v86 = vcvt.s32.f32 %v84
    %v87 = vcvt.s32.f32 %v85
    %88 = vmax.xlane.f32.xlu0 %v87
    %v89 = vpop.xlane.xlu0 %88
    %vm90 = vcmp.eq.f32.partialorder %v87, %v89
    %v91 = vsel %vm90, %v86, -inf
    %92 = vmax.xlane.f32.xlu0 %v91
    %v93 = vpop.xlane.xlu0 %92
    %v94 = vcvt.f32.s32 %v93
    %v95 = vcvt.f32.s32 %v89
    %v96 = vshll.u32 %v95, 16
    %v97 = vadd.s32 %v96, %v94
    %vm98 = vcmp.ge.s32.totalorder %v97, 0
    %v99 = vsel %vm98, %v79, 0
    %v100 = vsel %vm98, %v97, 255
    %v101 = vsub.s32 %v60, %v99
    %v102 = vsub.s32 %v61, %v99
    %v103 = vsub.s32 %v100, %v99
    %vm104 = vcmp.le.u32.totalorder %v101, %v103
    %vm105 = vcmp.le.u32.totalorder %v102, %v103
    %v106 = vsub.f32 %v35, %v37
    %v107 = vsub.f32 %v36, %v38
    %v108 = vmul.f32 %v106, %v106
    %v109 = vmul.f32 %v107, %v107
    %v110 = vsel %vm104, %v108, 0.0
    %v111 = vsel %vm105, %v109, 0.0
    %v112 = vadd.f32 %v110, %v111
    %113 = vadd.xlane.f32.xlu0 %v112
    %v114 = vpop.xlane.xlu0 %113
    %v115 = vadd.s32 %v103, 1
    %v116 = vcvt.s32.f32 %v115
    %v117 = vrcp.pop %v116
    %v118 = vmul.f32 %v114, %v117
    %vm119 = vcmask 7168
    %120 = vst.msk [vmem:[%s2] sm:$0xff] %vm119, %v118
    // Predicated region
    $region18: #{tpu_custom_call.1} parent=1 // pred_check
      _
    $region19: #{tpu_custom_call.1} parent=1 // pred_check_branch
      %122 = sbr.rel (0) target = $region21
    $region20: #{tpu_custom_call.1} parent=1 // pred_region
      _
    $region21: #{tpu_custom_call.1} parent=1 // pred_fallthru
      _
    // Predicated region
    $region22: #{tpu_custom_call.1} parent=1 // pred_check
      _
    $region23: #{tpu_custom_call.1} parent=1 // pred_check_branch
      %124 = sbr.rel (0) target = $region25
    $region24: #{tpu_custom_call.1} parent=1 // pred_region
      _
    $region25: #{tpu_custom_call.1} parent=1 // pred_fallthru
      _
    %125 = vsyncpa [#allocation3], 1
    %126 = vsyncpa [#allocation5], 1

</llo_original>
